<compile_context>
chip_gen: v7x
topology: tpu7x:2x2x1
jax: 0.10.0
libtpu: 0.0.40
codegen_flags: <defaults>
</compile_context>

<pallas_src>
import jax
import jax.numpy as jnp
from jax.experimental import pallas as pl
from jax.experimental.pallas import tpu as pltpu

M_PLUS = 0.9
M_MINUS = 0.1
LOSS_LAMBDA = 1.0


def _vmem_limit_and_budget():
    """Generation-aware scoped-VMEM limit + per-step tile budget (bytes)."""
    cap = 64 * 1024 * 1024                       # conservative fallback (v7x-sized)
    try:
        info = pltpu.get_tpu_info()
        c = getattr(info, "vmem_capacity_bytes", None)
        if c:
            cap = int(c)
    except Exception:
        pass
    # v5e/v6e (128 MiB physical) -> 96 MiB scoped limit, 48 MiB tile budget.
    # v7x    ( 64 MiB physical)  -> 48 MiB scoped limit, 24 MiB tile budget.
    limit = min((cap * 3) // 4, 96 * 1024 * 1024)
    return limit, limit // 2


def _compute_lc(x_ref, t_ref):
    """x_ref: (R, L, C) Ref, t_ref: (R, C) Ref -> L_c (R, C) in f32.

    The L-reduction is an unrolled accumulation over the static L (strided
    native-dtype slice loads + VPU FMAs) instead of materializing the full
    (R, L, C) f32 tile and doing a cross-sublane (XLU) jnp.sum(axis=1).
    """
    R, L, C = x_ref.shape
    sq = jnp.zeros((R, C), jnp.float32)
    for l in range(L):                           # static unroll; L is small
        xl = x_ref[:, l, :].astype(jnp.float32)
        sq = sq + xl * xl
    v_mag = jnp.sqrt(sq)
    t = t_ref[...].astype(jnp.float32)
    max_l = jnp.maximum(M_PLUS - v_mag, 0.0)
    max_r = jnp.maximum(v_mag - M_MINUS, 0.0)
    return t * (max_l * max_l) + LOSS_LAMBDA * (1.0 - t) * (max_r * max_r)


def _partial_sum_tile(lc):
    """Reduce (R, C) f32 -> (8, 128) partial-sum tile using VPU adds only
    (no cross-lane / cross-sublane XLU reduce). R is a multiple of 8."""
    R, C = lc.shape
    n = R // 8
    nacc = min(4, n)                             # break the add dependency chain
    slabs = [jnp.zeros((8, C), jnp.float32) for _ in range(nacc)]
    for k in range(n):                           # row fold: 8-row aligned chunks
        slabs[k % nacc] = slabs[k % nacc] + lc[8 * k:8 * (k + 1), :]
    slab = slabs[0]
    for k in range(1, nacc):
        slab = slab + slabs[k]
    acc = jnp.zeros((8, 128), jnp.float32)       # lane fold: 128-lane chunks
    c0 = 0
    while c0 + 128 <= C:
        acc = acc + slab[:, c0:c0 + 128]
        c0 += 128
    if c0 < C:                                   # ragged lane tail (C % 128 != 0)
        pad = jnp.zeros((8, 128 - (C - c0)), jnp.float32)
        acc = acc + jnp.concatenate([slab[:, c0:], pad], axis=1)
    return acc


def _make_mean_kernel(rows, hw, row_tile, hw_tile):
    mask_rows = (rows % row_tile) != 0
    mask_cols = (hw % hw_tile) != 0

    def kernel(x_ref, t_ref, psum_ref):
        lc = _compute_lc(x_ref, t_ref)
        if mask_rows or mask_cols:               # tail blocks: zero invalid entries
            valid = None
            if mask_rows:
                rid = pl.program_id(0) * row_tile + jax.lax.broadcasted_iota(
                    jnp.int32, (row_tile, hw_tile), 0)
                valid = rid < rows
            if mask_cols:
                cid = pl.program_id(1) * hw_tile + jax.lax.broadcasted_iota(
                    jnp.int32, (row_tile, hw_tile), 1)
                cvalid = cid < hw
                valid = cvalid if valid is None else valid & cvalid
            lc = jnp.where(valid, lc, 0.0)
        psum_ref[...] = _partial_sum_tile(lc).reshape(psum_ref.shape)

    return kernel


def _map_kernel(x_ref, t_ref, lc_ref):
    # Out-of-bounds rows/cols of boundary blocks are dropped by Pallas on
    # writeback, so no explicit masking is needed on the elementwise path.
    lc_ref[...] = _compute_lc(x_ref, t_ref).astype(lc_ref.dtype)


def margin_loss(inputs, targets, mask=None, *, num_keypoints, l_vec,
                size_average=True, lc_dtype=None):
    """inputs: (B, K*L, H, W); targets: (B, K, H, W); mask unused (as in PyTorch)."""
    del mask  # not used by the reference forward pass
    B, C, H, W = inputs.shape
    K = num_keypoints + 1
    L = l_vec
    assert C == K * L, f"channel dim {C} != K*L = {K * L}"
    HW = H * W
    rows = B * K
    lc_dtype = inputs.dtype if lc_dtype is None else lc_dtype

    # Pure contiguous (free) reshapes; native dtype is DMA'd, upcast in-kernel.
    x = inputs.reshape(rows, L, HW)
    t = targets.reshape(rows, HW)

    vmem_limit, budget = _vmem_limit_and_budget()
    x_isz = jnp.dtype(x.dtype).itemsize
    t_isz = jnp.dtype(t.dtype).itemsize
    o_isz = 0 if size_average else jnp.dtype(lc_dtype).itemsize
    # Per (row, hw)-element VMEM cost: double-buffered x & t, (map) output,
    # plus ~32 B for in-kernel f32 temporaries (sq / v_mag / L_c / masks).
    per_elem = 2 * L * x_isz + 2 * t_isz + 2 * o_isz + 32

    # Lane tiling: prefer full HW (single lane-dense block); fall back to
    # 128-multiples only when even an 8-row slab at full HW blows the budget.
    if 8 * HW * per_elem > budget:
        hw_tile = max(128, min(HW, budget // (8 * per_elem)) // 128 * 128)
    else:
        hw_tile = HW
    # NOTE: if HW is not a multiple of 128 (e.g. 14x14 maps) the lane dim is
    # padded / partially stored; repacking HW wrapper-side to a 128-multiple
    # slab is a perf-only option left to the caller.

    rows8 = ((rows + 7) // 8) * 8
    row_tile = max(8, (budget // (hw_tile * per_elem)) // 8 * 8)
    row_tile = min(row_tile, rows8)
    num_row_blocks = -(-rows // row_tile)
    num_hw_blocks = -(-HW // hw_tile)
    # Keep >= 2 blocks when the data allows it so the "parallel" grid axes can
    # shard across v7x's two TensorCores (harmless on 1-TC v5e/v6e).
    if num_row_blocks * num_hw_blocks == 1 and rows8 >= 16:
        row_tile = max(8, (rows8 // 2) // 8 * 8)
        num_row_blocks = -(-rows // row_tile)

    grid = (num_row_blocks, num_hw_blocks)
    in_specs = [
        pl.BlockSpec((row_tile, L, hw_tile), lambda i, j: (i, 0, j)),
        pl.BlockSpec((row_tile, hw_tile), lambda i, j: (i, j)),
    ]
    cparams = pltpu.CompilerParams(
        dimension_semantics=("parallel", "parallel"),
        vmem_limit_bytes=int(vmem_limit),
    )

    if size_average:
        psums = pl.pallas_call(
            _make_mean_kernel(rows, HW, row_tile, hw_tile),
            out_shape=jax.ShapeDtypeStruct(
                (num_row_blocks, num_hw_blocks, 8, 128), jnp.float32),
            grid_spec=pltpu.PrefetchScalarGridSpec(
                num_scalar_prefetch=0,
                grid=grid,
                in_specs=in_specs,
                out_specs=pl.BlockSpec((1, 1, 8, 128),
                                       lambda i, j: (i, j, 0, 0)),
            ),
            compiler_params=cparams,
        )(x, t)
        inv_n = 1.0 / float(rows * HW)           # trace-time constant, no divide
        return jnp.sum(psums) * inv_n

    lc = pl.pallas_call(
        _map_kernel,
        out_shape=jax.ShapeDtypeStruct((rows, HW), lc_dtype),
        grid_spec=pltpu.PrefetchScalarGridSpec(
            num_scalar_prefetch=0,
            grid=grid,
            in_specs=in_specs,
            out_specs=pl.BlockSpec((row_tile, hw_tile), lambda i, j: (i, j)),
        ),
        compiler_params=cparams,
    )(x, t)
    return lc.reshape(B, K, H, W)


def _ref_margin_loss(inputs, targets, num_keypoints, l_vec, size_average=True):
    B, C, H, W = inputs.shape
    K = num_keypoints + 1
    x = inputs.reshape(B, K, l_vec, H, W).astype(jnp.float32)
    v_mag = jnp.sqrt((x ** 2).sum(axis=2))
    max_l = jnp.maximum(M_PLUS - v_mag, 0.0) ** 2
    max_r = jnp.maximum(v_mag - M_MINUS, 0.0) ** 2
    T_c = targets.astype(jnp.float32)
    L_c = T_c * max_l + LOSS_LAMBDA * (1.0 - T_c) * max_r
    return L_c.mean() if size_average else L_c


if __name__ == "__main__":
    # configer: data/num_keypoints = 4  -> K = 5 ;  capsule/l_vec = 8
    num_keypoints = 4
    l_vec = 8
    B, H, W = 2, 16, 16
    K = num_keypoints + 1

    key = jax.random.PRNGKey(0)
    k1, k2, _ = jax.random.split(key, 3)
    inputs = jax.random.normal(k1, (B, K * l_vec, H, W), dtype=jnp.float32)
    # one-hot-ish targets in {0, 1}
    targets = (jax.random.uniform(k2, (B, K, H, W)) > 0.5).astype(jnp.float32)
    mask = jnp.ones((B, K, H, W), dtype=jnp.float32)  # unused, as in PyTorch

    loss = margin_loss(inputs, targets, mask,
                       num_keypoints=num_keypoints, l_vec=l_vec,
                       size_average=True)
    loss = jax.block_until_ready(loss)

    ref = _ref_margin_loss(inputs, targets, num_keypoints, l_vec, True)
    assert jnp.allclose(loss, ref, rtol=1e-5, atol=1e-6), (loss, ref)

    # also exercise the non-averaged (elementwise) path
    lc_map = jax.block_until_ready(
        margin_loss(inputs, targets, mask,
                    num_keypoints=num_keypoints, l_vec=l_vec,
                    size_average=False))
    ref_map = _ref_margin_loss(inputs, targets, num_keypoints, l_vec, False)
    assert jnp.allclose(lc_map, ref_map, rtol=1e-5, atol=1e-6)

    print("KERNEL_OK")
</pallas_src>

<mosaic_0001>
module attributes {stable_mosaic.version = 11 : i64} {
  func.func @kernel(%arg0: i32, %arg1: i32, %arg2: memref<8x8x256xf32, #tpu.memory_space<vmem>>, %arg3: memref<8x256xf32, #tpu.memory_space<vmem>>, %arg4: memref<1x1x8x128xf32, #tpu.memory_space<vmem>>) attributes {dimension_semantics = [#tpu.dimension_semantics<parallel>, #tpu.dimension_semantics<parallel>], iteration_bounds = array<i64: 2, 1>, scalar_prefetch = 0 : i64, scratch_operands = 0 : i64, tpu.core_type = #tpu.core_type<tc>, window_params = [{transform_indices = @transform_0, window_bounds = array<i64: 8, 8, 256>}, {transform_indices = @transform_1, window_bounds = array<i64: 8, 256>}, {transform_indices = @transform_2, window_bounds = array<i64: 1, 1, 8, 128>}]} {
    %cst = arith.constant 0.000000e+00 : f32
    %0 = vector.broadcast %cst : f32 to vector<8x256xf32>
    %c0 = arith.constant 0 : index
    %c0_0 = arith.constant 0 : index
    %c0_1 = arith.constant 0 : index
    %1 = vector.load %arg2[%c0, %c0_0, %c0_1] : memref<8x8x256xf32, #tpu.memory_space<vmem>>, vector<8x1x256xf32>
    %2 = vector.shape_cast %1 : vector<8x1x256xf32> to vector<8x256xf32>
    %3 = arith.mulf %2, %2 : vector<8x256xf32>
    %4 = arith.addf %0, %3 : vector<8x256xf32>
    %c0_2 = arith.constant 0 : index
    %c1 = arith.constant 1 : index
    %c0_3 = arith.constant 0 : index
    %5 = vector.load %arg2[%c0_2, %c1, %c0_3] : memref<8x8x256xf32, #tpu.memory_space<vmem>>, vector<8x1x256xf32>
    %6 = vector.shape_cast %5 : vector<8x1x256xf32> to vector<8x256xf32>
    %7 = arith.mulf %6, %6 : vector<8x256xf32>
    %8 = arith.addf %4, %7 : vector<8x256xf32>
    %c0_4 = arith.constant 0 : index
    %c2 = arith.constant 2 : index
    %c0_5 = arith.constant 0 : index
    %9 = vector.load %arg2[%c0_4, %c2, %c0_5] : memref<8x8x256xf32, #tpu.memory_space<vmem>>, vector<8x1x256xf32>
    %10 = vector.shape_cast %9 : vector<8x1x256xf32> to vector<8x256xf32>
    %11 = arith.mulf %10, %10 : vector<8x256xf32>
    %12 = arith.addf %8, %11 : vector<8x256xf32>
    %c0_6 = arith.constant 0 : index
    %c3 = arith.constant 3 : index
    %c0_7 = arith.constant 0 : index
    %13 = vector.load %arg2[%c0_6, %c3, %c0_7] : memref<8x8x256xf32, #tpu.memory_space<vmem>>, vector<8x1x256xf32>
    %14 = vector.shape_cast %13 : vector<8x1x256xf32> to vector<8x256xf32>
    %15 = arith.mulf %14, %14 : vector<8x256xf32>
    %16 = arith.addf %12, %15 : vector<8x256xf32>
    %c0_8 = arith.constant 0 : index
    %c4 = arith.constant 4 : index
    %c0_9 = arith.constant 0 : index
    %17 = vector.load %arg2[%c0_8, %c4, %c0_9] : memref<8x8x256xf32, #tpu.memory_space<vmem>>, vector<8x1x256xf32>
    %18 = vector.shape_cast %17 : vector<8x1x256xf32> to vector<8x256xf32>
    %19 = arith.mulf %18, %18 : vector<8x256xf32>
    %20 = arith.addf %16, %19 : vector<8x256xf32>
    %c0_10 = arith.constant 0 : index
    %c5 = arith.constant 5 : index
    %c0_11 = arith.constant 0 : index
    %21 = vector.load %arg2[%c0_10, %c5, %c0_11] : memref<8x8x256xf32, #tpu.memory_space<vmem>>, vector<8x1x256xf32>
    %22 = vector.shape_cast %21 : vector<8x1x256xf32> to vector<8x256xf32>
    %23 = arith.mulf %22, %22 : vector<8x256xf32>
    %24 = arith.addf %20, %23 : vector<8x256xf32>
    %c0_12 = arith.constant 0 : index
    %c6 = arith.constant 6 : index
    %c0_13 = arith.constant 0 : index
    %25 = vector.load %arg2[%c0_12, %c6, %c0_13] : memref<8x8x256xf32, #tpu.memory_space<vmem>>, vector<8x1x256xf32>
    %26 = vector.shape_cast %25 : vector<8x1x256xf32> to vector<8x256xf32>
    %27 = arith.mulf %26, %26 : vector<8x256xf32>
    %28 = arith.addf %24, %27 : vector<8x256xf32>
    %c0_14 = arith.constant 0 : index
    %c7 = arith.constant 7 : index
    %c0_15 = arith.constant 0 : index
    %29 = vector.load %arg2[%c0_14, %c7, %c0_15] : memref<8x8x256xf32, #tpu.memory_space<vmem>>, vector<8x1x256xf32>
    %30 = vector.shape_cast %29 : vector<8x1x256xf32> to vector<8x256xf32>
    %31 = arith.mulf %30, %30 : vector<8x256xf32>
    %32 = arith.addf %28, %31 : vector<8x256xf32>
    %33 = math.sqrt %32 : vector<8x256xf32>
    %c0_16 = arith.constant 0 : index
    %c0_17 = arith.constant 0 : index
    %34 = vector.load %arg3[%c0_16, %c0_17] : memref<8x256xf32, #tpu.memory_space<vmem>>, vector<8x256xf32>
    %cst_18 = arith.constant 0.899999976 : f32
    %35 = vector.broadcast %cst_18 : f32 to vector<8x256xf32>
    %36 = arith.subf %35, %33 : vector<8x256xf32>
    %cst_19 = arith.constant 0.000000e+00 : f32
    %37 = vector.broadcast %cst_19 : f32 to vector<8x256xf32>
    %38 = arith.maximumf %36, %37 : vector<8x256xf32>
    %cst_20 = arith.constant 1.000000e-01 : f32
    %39 = vector.broadcast %cst_20 : f32 to vector<8x256xf32>
    %40 = arith.subf %33, %39 : vector<8x256xf32>
    %cst_21 = arith.constant 0.000000e+00 : f32
    %41 = vector.broadcast %cst_21 : f32 to vector<8x256xf32>
    %42 = arith.maximumf %40, %41 : vector<8x256xf32>
    %43 = arith.mulf %38, %38 : vector<8x256xf32>
    %44 = arith.mulf %34, %43 : vector<8x256xf32>
    %cst_22 = arith.constant 1.000000e+00 : f32
    %45 = vector.broadcast %cst_22 : f32 to vector<8x256xf32>
    %46 = arith.subf %45, %34 : vector<8x256xf32>
    %cst_23 = arith.constant 1.000000e+00 : f32
    %47 = vector.broadcast %cst_23 : f32 to vector<8x256xf32>
    %48 = arith.mulf %47, %46 : vector<8x256xf32>
    %49 = arith.mulf %42, %42 : vector<8x256xf32>
    %50 = arith.mulf %48, %49 : vector<8x256xf32>
    %51 = arith.addf %44, %50 : vector<8x256xf32>
    %c8_i32 = arith.constant 8 : i32
    %52 = arith.muli %arg0, %c8_i32 : i32
    %53 = tpu.iota {dimensions = array<i32: 0>} : vector<8x256xi32>
    %54 = vector.broadcast %52 : i32 to vector<8x256xi32>
    %55 = arith.addi %54, %53 : vector<8x256xi32>
    %c10_i32 = arith.constant 10 : i32
    %56 = vector.broadcast %c10_i32 : i32 to vector<8x256xi32>
    %57 = arith.cmpi slt, %55, %56 : vector<8x256xi32>
    %cst_24 = arith.constant 0.000000e+00 : f32
    %58 = vector.broadcast %cst_24 : f32 to vector<8x256xf32>
    %59 = arith.select %57, %51, %58 : vector<8x256xi1>, vector<8x256xf32>
    %cst_25 = arith.constant 0.000000e+00 : f32
    %60 = vector.broadcast %cst_25 : f32 to vector<8x256xf32>
    %61 = arith.addf %60, %59 : vector<8x256xf32>
    %cst_26 = arith.constant 0.000000e+00 : f32
    %62 = vector.broadcast %cst_26 : f32 to vector<8x128xf32>
    %63 = vector.extract_strided_slice %61 {offsets = [0, 0], sizes = [8, 128], strides = [1, 1]} : vector<8x256xf32> to vector<8x128xf32>
    %64 = arith.addf %62, %63 : vector<8x128xf32>
    %65 = vector.extract_strided_slice %61 {offsets = [0, 128], sizes = [8, 128], strides = [1, 1]} : vector<8x256xf32> to vector<8x128xf32>
    %66 = arith.addf %64, %65 : vector<8x128xf32>
    %67 = vector.shape_cast %66 : vector<8x128xf32> to vector<1x1x8x128xf32>
    %c0_27 = arith.constant 0 : index
    %c0_28 = arith.constant 0 : index
    %c0_29 = arith.constant 0 : index
    %c0_30 = arith.constant 0 : index
    %68 = vector.load %arg4[%c0_27, %c0_28, %c0_29, %c0_30] : memref<1x1x8x128xf32, #tpu.memory_space<vmem>>, vector<1x1x8x128xf32>
    tpu.vector_store %arg4[%c0_27, %c0_28, %c0_29, %c0_30], %67 {strides = array<i32>} : memref<1x1x8x128xf32, #tpu.memory_space<vmem>>, vector<1x1x8x128xf32>,
    return
  }
  func.func @transform_0(%arg0: i32, %arg1: i32) -> (i32, i32, i32) {
    %c0_i32 = arith.constant 0 : i32
    %c0_i32_0 = arith.constant 0 : i32
    return %arg0, %c0_i32, %arg1 : i32, i32, i32
  }
  func.func @transform_1(%arg0: i32, %arg1: i32) -> (i32, i32) {
    %c0_i32 = arith.constant 0 : i32
    return %arg0, %arg1 : i32, i32
  }
  func.func @transform_2(%arg0: i32, %arg1: i32) -> (i32, i32, i32, i32) {
    %c0_i32 = arith.constant 0 : i32
    %c0_i32_0 = arith.constant 0 : i32
    %c0_i32_1 = arith.constant 0 : i32
    return %arg0, %arg1, %c0_i32, %c0_i32_0 : i32, i32, i32, i32
  }
}

</mosaic_0001>

<llo_original>
// kernel: tpu_custom_call.1
$region0: #{tpu_custom_call.1}
  #allocation0 [shape = 'u32[]', space=smem, size = 0x4, offset = 0x4, fixed_abs, tag = 'smem constant byte address 0x4 - core index']
  #allocation1 [shape = 'u32[144,128]{1,0:T(1,128)}', space=vmem, size = 0x12000, scoped, tag = 'internal scratch']
  %s0 = inlined_call_operand.hbm [shape: f32[10,8,256], index: 0, kind: input, shape index: {}]
  %s1 = inlined_call_operand.hbm [shape: f32[10,256], index: 1, kind: input, shape index: {}]
  %s2 = inlined_call_operand.hbm [shape: f32[2,1,8,128], index: 2, kind: output, shape index: {}]
  %s3 = sld [smem:[#allocation0]]
  $region49: #{tpu_custom_call.1} parent=0
    _
  %s5 = ssub.s32 1, %s3
  %s6 = scalar_select 0, %s5, %s3
  $region1: #{tpu_custom_call.1} parent=0
    #allocation2 [shape = 'u8[131072]{0}', space=vmem, size = 0x20000, scoped, tag = 'input window, operand 0']
    #allocation3 [shape = 's32[2]{0}', space=sflag, size = 0x8, scoped, tag = 'scoped memory for tpu_custom_call.1']
    #allocation4 [shape = 's32[2]{0}', space=sflag, size = 0x8, scoped, tag = 'scoped memory for tpu_custom_call.1']
    #allocation5 [shape = 'u8[16384]{0}', space=vmem, size = 0x4000, scoped, tag = 'input window, operand 1']
    #allocation6 [shape = 's32[2]{0}', space=sflag, size = 0x8, scoped, tag = 'scoped memory for tpu_custom_call.1']
    #allocation7 [shape = 'u8[8192]{0}', space=vmem, size = 0x2000, scoped, tag = 'output window, operand 0']
    %7 = vsyncpa [#allocation3], 0
    %s8 = scalar_lea.sflag [#allocation3], 1
    %9 = vsyncpa %s8, 0
    %10 = vsyncpa [#allocation6], 0
    %s11 = scalar_lea.sflag [#allocation6], 1
    %12 = vsyncpa %s11, 0
    %13 = vsyncpa [#allocation4], 0
    %s14 = scalar_lea.sflag [#allocation4], 1
    %15 = vsyncpa %s14, 0
    loop: start=0, step=1, limit=4
    $region2: #{tpu_custom_call.1} parent=1 // loop_pre_header
      _
    $region3: #{tpu_custom_call.1} parent=1 // loop_header
      %s17 = sphi 0, %s21
      %p18 = scmp.ge.s32.totalorder %s17, 4
      %s24 = sphi 0, %s36
      %s25 = sphi 0, %s32
      %s26 = sphi 0, %s24
      %s27 = sphi 0, %s25
      %s28 = sphi 0, %s26
      %s29 = sphi 0, %s27
      %s41 = sphi 0, %s43
      %s44 = sphi 0, %s41
      %s45 = sphi 0, %s44
      %s61 = sphi 0, %s45
      %s69 = sphi 0, %s71
      %s72 = sphi 0, %s69
      %s73 = sphi 0, %s72
      %s89 = sphi 0, %s73
      %s97 = sphi 0, %s99
      %s100 = sphi 0, %s97
      %s101 = sphi 0, %s100
      %s117 = sphi 0, %s101
    $region4: #{tpu_custom_call.1} parent=1 // loop_header_branch
      %20 = sbr.rel (%p18) target = $region8
    $region5: #{tpu_custom_call.1} parent=1 // loop_body
      %s22 = ssub.s32 %s17, 1
      %s23 = ssub.s32 %s17, 2
      %s30 = sadd.s32 1, %s25
      %p31 = scmp.ge.s32.totalorder %s30, 1
      %s32 = scalar_select %p31, 0, %s30
      %s33 = sadd.s32 1, %s24
      %s34 = scalar_select %p31, %s33, %s24
      %p35 = scmp.ge.s32.totalorder %s34, 2
      %s36 = scalar_select %p35, 0, %s34
      %s37 = ssub.s32 %s24, %s36
      %s38 = ssub.s32 %s25, %s32
      %s39 = sor.u32 %s37, %s38
      %p40 = scmp.eq.s32.totalorder %s39, 0
      %s42 = sadd.s32 %s41, 1
      %s43 = scalar_select %p40, %s41, %s42
      %p46 = pneg %p40
      %p47 = scmp.eq.s32.totalorder %s17, 1
      %p48 = por %p46, %p47
      %p49 = scmp.ne.s32.totalorder %s41, %s44
      %p50 = scmp.eq.s32.totalorder %s17, 0
      %p51 = por %p49, %p50
      %p52 = scmp.ne.s32.totalorder %s41, %s44
      %p53 = scmp.eq.s32.totalorder %s22, 1
      %p54 = por %p52, %p53
      %p55 = scmp.ne.s32.totalorder %s44, %s45
      %p56 = scmp.eq.s32.totalorder %s22, 0
      %p57 = por %p55, %p56
      %p58 = scmp.ne.s32.totalorder %s44, %s45
      %p59 = scmp.eq.s32.totalorder %s23, 1
      %p60 = por %p58, %p59
      %p62 = scmp.ne.s32.totalorder %s45, %s61
      %p63 = scmp.eq.s32.totalorder %s23, 0
      %p64 = por %p62, %p63
      %s65 = ssub.s32 %s24, %s36
      %s66 = ssub.s32 %s25, %s32
      %s67 = sor.u32 %s65, %s66
      %p68 = scmp.eq.s32.totalorder %s67, 0
      %s70 = sadd.s32 %s69, 1
      %s71 = scalar_select %p68, %s69, %s70
      %p74 = pneg %p68
      %p75 = scmp.eq.s32.totalorder %s17, 1
      %p76 = por %p74, %p75
      %p77 = scmp.ne.s32.totalorder %s69, %s72
      %p78 = scmp.eq.s32.totalorder %s17, 0
      %p79 = por %p77, %p78
      %p80 = scmp.ne.s32.totalorder %s69, %s72
      %p81 = scmp.eq.s32.totalorder %s22, 1
      %p82 = por %p80, %p81
      %p83 = scmp.ne.s32.totalorder %s72, %s73
      %p84 = scmp.eq.s32.totalorder %s22, 0
      %p85 = por %p83, %p84
      %p86 = scmp.ne.s32.totalorder %s72, %s73
      %p87 = scmp.eq.s32.totalorder %s23, 1
      %p88 = por %p86, %p87
      %p90 = scmp.ne.s32.totalorder %s73, %s89
      %p91 = scmp.eq.s32.totalorder %s23, 0
      %p92 = por %p90, %p91
      %s93 = ssub.s32 %s24, %s36
      %s94 = ssub.s32 %s25, %s32
      %s95 = sor.u32 %s93, %s94
      %p96 = scmp.eq.s32.totalorder %s95, 0
      %s98 = sadd.s32 %s97, 1
      %s99 = scalar_select %p96, %s97, %s98
      %p102 = pneg %p96
      %p103 = scmp.eq.s32.totalorder %s17, 1
      %p104 = por %p102, %p103
      %p105 = scmp.ne.s32.totalorder %s97, %s100
      %p106 = scmp.eq.s32.totalorder %s17, 0
      %p107 = por %p105, %p106
      %p108 = scmp.ne.s32.totalorder %s97, %s100
      %p109 = scmp.eq.s32.totalorder %s22, 1
      %p110 = por %p108, %p109
      %p111 = scmp.ne.s32.totalorder %s100, %s101
      %p112 = scmp.eq.s32.totalorder %s22, 0
      %p113 = por %p111, %p112
      %p114 = scmp.ne.s32.totalorder %s100, %s101
      %p115 = scmp.eq.s32.totalorder %s23, 1
      %p116 = por %p114, %p115
      %p118 = scmp.ne.s32.totalorder %s101, %s117
      %p119 = scmp.eq.s32.totalorder %s23, 0
      %p120 = por %p118, %p119
      %p121 = scmp.le.s32.totalorder 1, %s17
      %p122 = scmp.lt.s32.totalorder %s17, 3
      %p123 = pnand %p121, %p122
      %p124 = pneg %p123
      // Predicated region
      $region9: #{tpu_custom_call.1} parent=5 // pred_check
        _
      $region10: #{tpu_custom_call.1} parent=5 // pred_check_branch
        %126 = sbr.rel (%p123) target = $region12
      $region11: #{tpu_custom_call.1} parent=5 // pred_region
        %s127 = ssub.s32 %s17, 1
      $region12: #{tpu_custom_call.1} parent=5 // pred_fallthru
        _
      %p128 = scmp.lt.s32.totalorder %s17, 2
      // Predicated region
      $region13: #{tpu_custom_call.1} parent=5 // pred_check
        %p129 = pneg %p128
      $region14: #{tpu_custom_call.1} parent=5 // pred_check_branch
        %131 = sbr.rel (%p129) target = $region16
      $region15: #{tpu_custom_call.1} parent=5 // pred_region
        // Predicated region
        $region17: #{tpu_custom_call.1} parent=15 // pred_check
          %p132 = pneg %p51
        $region18: #{tpu_custom_call.1} parent=15 // pred_check_branch
          %134 = sbr.rel (%p132) target = $region20
        $region19: #{tpu_custom_call.1} parent=15 // pred_region
          %s135 = sand.u32 %s41, 1
          %s136 = scalar_lea.sflag [#allocation3], %s135
          %s137 = sand.u32 %s41, 1
          %s138 = smul.addr %s137, 128
          %s139 = scalar_lea.vmem [#allocation2], %s138
          %s140 = smul.u32 8, %s24
          %s141 = smul.u32 2, %s25
          %s142 = ssub.s32 10, %s140
          %p143 = scmp.lt.s32.totalorder %s142, 8
          %s144 = scalar_select %p143, %s142, 8
          %s145 = smul.u32 128, %s144
          %s146 = smul.u32 %s145, 2
          %s148 = ssub.s32 2048, %s146
          %149 = vsyncadd %s136, %s148
          %p150 = scmp.ne.s32.totalorder 0, %s146
          %s151 = smul.addr %s140, 2
          %s152 = sadd.s32 %s141, %s151
          %s153 = smul.addr %s152, 128
          %s154 = scalar_lea.hbm %s0, %s153
          %s155 = smul.u32 16, %s144
          %s156 = sshll.u32 %s139, 4
          %s157 = int_to_ptr.vmem [resolvable:$true] %s156
          %s158 = sshll.u32 %s155, 4
          %162 = dma.hbm_to_vmem [thread:$0]  (%p150), %s154, %s158, %s157, %s136, 256, 256, 16
        $region20: #{tpu_custom_call.1} parent=15 // pred_fallthru
          _
        // Predicated region
        $region21: #{tpu_custom_call.1} parent=15 // pred_check
          %p163 = pneg %p79
        $region22: #{tpu_custom_call.1} parent=15 // pred_check_branch
          %165 = sbr.rel (%p163) target = $region24
        $region23: #{tpu_custom_call.1} parent=15 // pred_region
          %s166 = sand.u32 %s69, 1
          %s167 = scalar_lea.sflag [#allocation6], %s166
          %s168 = sand.u32 %s69, 1
          %s169 = smul.addr %s168, 16
          %s170 = scalar_lea.vmem [#allocation5], %s169
          %s171 = smul.u32 2, %s25
          %s173 = ssub.s32 256, 256
          %174 = vsyncadd %s167, %s173
          %s175 = smul.addr %s24, 2
          %s176 = sadd.s32 %s171, %s175
          %s177 = smul.addr %s176, 128
          %s178 = scalar_lea.hbm %s1, %s177
          %s180 = sshll.u32 %s170, 4
          %s181 = int_to_ptr.vmem [resolvable:$true] %s180
          %183 = dma.hbm_to_vmem [thread:$0]  %s178, 256, %s181, %s167
        $region24: #{tpu_custom_call.1} parent=15 // pred_fallthru
          _
      $region16: #{tpu_custom_call.1} parent=5 // pred_fallthru
        _
      %p184 = scmp.le.s32.totalorder 1, %s17
      %p185 = scmp.lt.s32.totalorder %s17, 3
      %p186 = pnand %p184, %p185
      %p187 = pneg %p186
      // Predicated region
      $region25: #{tpu_custom_call.1} parent=5 // pred_check
        _
      $region26: #{tpu_custom_call.1} parent=5 // pred_check_branch
        %189 = sbr.rel (%p186) target = $region28
      $region27: #{tpu_custom_call.1} parent=5 // pred_region
        %s190 = ssub.s32 %s17, 1
        %s191 = sand.u32 %s44, 1
        %s192 = scalar_lea.sflag [#allocation3], %s191
        %s193 = sand.u32 %s44, 1
        %s194 = smul.addr %s193, 128
        %s195 = scalar_lea.vmem [#allocation2], %s194
        // Predicated region
        $region29: #{tpu_custom_call.1} parent=27 // pred_check
          %p196 = pneg %p57
        $region30: #{tpu_custom_call.1} parent=27 // pred_check_branch
          %198 = sbr.rel (%p196) target = $region32
        $region31: #{tpu_custom_call.1} parent=27 // pred_region
          %199 = dma.done %s192, 2048
        $region32: #{tpu_custom_call.1} parent=27 // pred_fallthru
          _
        %s200 = sand.u32 %s72, 1
        %s201 = scalar_lea.sflag [#allocation6], %s200
        %s202 = sand.u32 %s72, 1
        %s203 = smul.addr %s202, 16
        %s204 = scalar_lea.vmem [#allocation5], %s203
        // Predicated region
        $region33: #{tpu_custom_call.1} parent=27 // pred_check
          %p205 = pneg %p85
        $region34: #{tpu_custom_call.1} parent=27 // pred_check_branch
          %207 = sbr.rel (%p205) target = $region36
        $region35: #{tpu_custom_call.1} parent=27 // pred_region
          %208 = dma.done %s201, 256
        $region36: #{tpu_custom_call.1} parent=27 // pred_fallthru
          _
        %s209 = sand.u32 %s44, 1
        %s210 = scalar_lea.sflag [#allocation3], %s209
        %s211 = sand.u32 %s44, 1
        %s212 = smul.addr %s211, 128
        %s213 = scalar_lea.vmem [#allocation2], %s212
        %p214 = pneg %p57
        %p215 = pneg %p54
        %s216 = sand.u32 %s72, 1
        %s217 = scalar_lea.sflag [#allocation6], %s216
        %s218 = sand.u32 %s72, 1
        %s219 = smul.addr %s218, 16
        %s220 = scalar_lea.vmem [#allocation5], %s219
        %p221 = pneg %p85
        %p222 = pneg %p82
        %p223 = pneg %p113
        %p224 = pneg %p110
        %s225 = sand.u32 %s100, 1
        %s226 = scalar_lea.sflag [#allocation4], %s225
        %s227 = sand.u32 %s100, 1
        %s228 = smul.addr %s227, 8
        %s229 = scalar_lea.vmem [#allocation7], %s228
        %s230 = smul.u32 8, %s26
        %s231 = smul.u32 2, %s27
        %s232 = ssub.s32 10, %s230
        %p233 = scmp.lt.s32.totalorder %s232, 8
        %s234 = scalar_select %p233, %s232, 8
        %s235 = smul.u32 128, %s234
        %s236 = smul.u32 %s235, 2
        %s237 = smul.u32 2, %s27
        %v238 = vld [vmem:[%s195] ss:$8 sm:$0x3]
        %s239 = scalar_lea.vmem %s195, 16 [#allocation2]
        %v240 = vld [vmem:[%s239] ss:$8 sm:$0x3]
        %s241 = scalar_lea.vmem %s195, 32 [#allocation2]
        %v242 = vld [vmem:[%s241] ss:$8 sm:$0x3]
        %s243 = scalar_lea.vmem %s195, 48 [#allocation2]
        %v244 = vld [vmem:[%s243] ss:$8 sm:$0x3]
        %s245 = scalar_lea.vmem %s195, 64 [#allocation2]
        %v246 = vld [vmem:[%s245] ss:$8 sm:$0x3]
        %s247 = scalar_lea.vmem %s195, 80 [#allocation2]
        %v248 = vld [vmem:[%s247] ss:$8 sm:$0x3]
        %s249 = scalar_lea.vmem %s195, 96 [#allocation2]
        %v250 = vld [vmem:[%s249] ss:$8 sm:$0x3]
        %s251 = scalar_lea.vmem %s195, 112 [#allocation2]
        %v252 = vld [vmem:[%s251] ss:$8 sm:$0x3]
        %v253 = vmul.f32 %v238, %v238
        %v254 = vmul.f32 %v240, %v240
        %v255 = vmul.f32 %v242, %v242
        %v256 = vmul.f32 %v244, %v244
        %v257 = vmul.f32 %v246, %v246
        %v258 = vmul.f32 %v248, %v248
        %v259 = vmul.f32 %v250, %v250
        %v260 = vmul.f32 %v252, %v252
        %v261 = vadd.f32 %v253, 0.0
        %v262 = vadd.f32 %v254, 0.0
        %v263 = vadd.f32 %v255, 0.0
        %v264 = vadd.f32 %v256, 0.0
        %v265 = vadd.f32 %v257, 0.0
        %v266 = vadd.f32 %v258, 0.0
        %v267 = vadd.f32 %v259, 0.0
        %v268 = vadd.f32 %v260, 0.0
        %s269 = scalar_lea.vmem %s195, 1 [#allocation2]
        %v270 = vld [vmem:[%s269] ss:$8 sm:$0x3]
        %s271 = scalar_lea.vmem %s195, 17 [#allocation2]
        %v272 = vld [vmem:[%s271] ss:$8 sm:$0x3]
        %s273 = scalar_lea.vmem %s195, 33 [#allocation2]
        %v274 = vld [vmem:[%s273] ss:$8 sm:$0x3]
        %s275 = scalar_lea.vmem %s195, 49 [#allocation2]
        %v276 = vld [vmem:[%s275] ss:$8 sm:$0x3]
        %s277 = scalar_lea.vmem %s195, 65 [#allocation2]
        %v278 = vld [vmem:[%s277] ss:$8 sm:$0x3]
        %s279 = scalar_lea.vmem %s195, 81 [#allocation2]
        %v280 = vld [vmem:[%s279] ss:$8 sm:$0x3]
        %s281 = scalar_lea.vmem %s195, 97 [#allocation2]
        %v282 = vld [vmem:[%s281] ss:$8 sm:$0x3]
        %s283 = scalar_lea.vmem %s195, 113 [#allocation2]
        %v284 = vld [vmem:[%s283] ss:$8 sm:$0x3]
        %v285 = vmul.f32 %v270, %v270
        %v286 = vmul.f32 %v272, %v272
        %v287 = vmul.f32 %v274, %v274
        %v288 = vmul.f32 %v276, %v276
        %v289 = vmul.f32 %v278, %v278
        %v290 = vmul.f32 %v280, %v280
        %v291 = vmul.f32 %v282, %v282
        %v292 = vmul.f32 %v284, %v284
        %v293 = vadd.f32 %v261, %v285
        %v294 = vadd.f32 %v262, %v286
        %v295 = vadd.f32 %v263, %v287
        %v296 = vadd.f32 %v264, %v288
        %v297 = vadd.f32 %v265, %v289
        %v298 = vadd.f32 %v266, %v290
        %v299 = vadd.f32 %v267, %v291
        %v300 = vadd.f32 %v268, %v292
        %s301 = scalar_lea.vmem %s195, 2 [#allocation2]
        %v302 = vld [vmem:[%s301] ss:$8 sm:$0x3]
        %s303 = scalar_lea.vmem %s195, 18 [#allocation2]
        %v304 = vld [vmem:[%s303] ss:$8 sm:$0x3]
        %s305 = scalar_lea.vmem %s195, 34 [#allocation2]
        %v306 = vld [vmem:[%s305] ss:$8 sm:$0x3]
        %s307 = scalar_lea.vmem %s195, 50 [#allocation2]
        %v308 = vld [vmem:[%s307] ss:$8 sm:$0x3]
        %s309 = scalar_lea.vmem %s195, 66 [#allocation2]
        %v310 = vld [vmem:[%s309] ss:$8 sm:$0x3]
        %s311 = scalar_lea.vmem %s195, 82 [#allocation2]
        %v312 = vld [vmem:[%s311] ss:$8 sm:$0x3]
        %s313 = scalar_lea.vmem %s195, 98 [#allocation2]
        %v314 = vld [vmem:[%s313] ss:$8 sm:$0x3]
        %s315 = scalar_lea.vmem %s195, 114 [#allocation2]
        %v316 = vld [vmem:[%s315] ss:$8 sm:$0x3]
        %v317 = vmul.f32 %v302, %v302
        %v318 = vmul.f32 %v304, %v304
        %v319 = vmul.f32 %v306, %v306
        %v320 = vmul.f32 %v308, %v308
        %v321 = vmul.f32 %v310, %v310
        %v322 = vmul.f32 %v312, %v312
        %v323 = vmul.f32 %v314, %v314
        %v324 = vmul.f32 %v316, %v316
        %v325 = vadd.f32 %v293, %v317
        %v326 = vadd.f32 %v294, %v318
        %v327 = vadd.f32 %v295, %v319
        %v328 = vadd.f32 %v296, %v320
        %v329 = vadd.f32 %v297, %v321
        %v330 = vadd.f32 %v298, %v322
        %v331 = vadd.f32 %v299, %v323
        %v332 = vadd.f32 %v300, %v324
        %s333 = scalar_lea.vmem %s195, 3 [#allocation2]
        %v334 = vld [vmem:[%s333] ss:$8 sm:$0x3]
        %s335 = scalar_lea.vmem %s195, 19 [#allocation2]
        %v336 = vld [vmem:[%s335] ss:$8 sm:$0x3]
        %s337 = scalar_lea.vmem %s195, 35 [#allocation2]
        %v338 = vld [vmem:[%s337] ss:$8 sm:$0x3]
        %s339 = scalar_lea.vmem %s195, 51 [#allocation2]
        %v340 = vld [vmem:[%s339] ss:$8 sm:$0x3]
        %s341 = scalar_lea.vmem %s195, 67 [#allocation2]
        %v342 = vld [vmem:[%s341] ss:$8 sm:$0x3]
        %s343 = scalar_lea.vmem %s195, 83 [#allocation2]
        %v344 = vld [vmem:[%s343] ss:$8 sm:$0x3]
        %s345 = scalar_lea.vmem %s195, 99 [#allocation2]
        %v346 = vld [vmem:[%s345] ss:$8 sm:$0x3]
        %s347 = scalar_lea.vmem %s195, 115 [#allocation2]
        %v348 = vld [vmem:[%s347] ss:$8 sm:$0x3]
        %v349 = vmul.f32 %v334, %v334
        %v350 = vmul.f32 %v336, %v336
        %v351 = vmul.f32 %v338, %v338
        %v352 = vmul.f32 %v340, %v340
        %v353 = vmul.f32 %v342, %v342
        %v354 = vmul.f32 %v344, %v344
        %v355 = vmul.f32 %v346, %v346
        %v356 = vmul.f32 %v348, %v348
        %v357 = vadd.f32 %v325, %v349
        %v358 = vadd.f32 %v326, %v350
        %v359 = vadd.f32 %v327, %v351
        %v360 = vadd.f32 %v328, %v352
        %v361 = vadd.f32 %v329, %v353
        %v362 = vadd.f32 %v330, %v354
        %v363 = vadd.f32 %v331, %v355
        %v364 = vadd.f32 %v332, %v356
        %s365 = scalar_lea.vmem %s195, 4 [#allocation2]
        %v366 = vld [vmem:[%s365] ss:$8 sm:$0x3]
        %s367 = scalar_lea.vmem %s195, 20 [#allocation2]
        %v368 = vld [vmem:[%s367] ss:$8 sm:$0x3]
        %s369 = scalar_lea.vmem %s195, 36 [#allocation2]
        %v370 = vld [vmem:[%s369] ss:$8 sm:$0x3]
        %s371 = scalar_lea.vmem %s195, 52 [#allocation2]
        %v372 = vld [vmem:[%s371] ss:$8 sm:$0x3]
        %s373 = scalar_lea.vmem %s195, 68 [#allocation2]
        %v374 = vld [vmem:[%s373] ss:$8 sm:$0x3]
        %s375 = scalar_lea.vmem %s195, 84 [#allocation2]
        %v376 = vld [vmem:[%s375] ss:$8 sm:$0x3]
        %s377 = scalar_lea.vmem %s195, 100 [#allocation2]
        %v378 = vld [vmem:[%s377] ss:$8 sm:$0x3]
        %s379 = scalar_lea.vmem %s195, 116 [#allocation2]
        %v380 = vld [vmem:[%s379] ss:$8 sm:$0x3]
        %v381 = vmul.f32 %v366, %v366
        %v382 = vmul.f32 %v368, %v368
        %v383 = vmul.f32 %v370, %v370
        %v384 = vmul.f32 %v372, %v372
        %v385 = vmul.f32 %v374, %v374
        %v386 = vmul.f32 %v376, %v376
        %v387 = vmul.f32 %v378, %v378
        %v388 = vmul.f32 %v380, %v380
        %v389 = vadd.f32 %v357, %v381
        %v390 = vadd.f32 %v358, %v382
        %v391 = vadd.f32 %v359, %v383
        %v392 = vadd.f32 %v360, %v384
        %v393 = vadd.f32 %v361, %v385
        %v394 = vadd.f32 %v362, %v386
        %v395 = vadd.f32 %v363, %v387
        %v396 = vadd.f32 %v364, %v388
        %s397 = scalar_lea.vmem %s195, 5 [#allocation2]
        %v398 = vld [vmem:[%s397] ss:$8 sm:$0x3]
        %s399 = scalar_lea.vmem %s195, 21 [#allocation2]
        %v400 = vld [vmem:[%s399] ss:$8 sm:$0x3]
        %s401 = scalar_lea.vmem %s195, 37 [#allocation2]
        %v402 = vld [vmem:[%s401] ss:$8 sm:$0x3]
        %s403 = scalar_lea.vmem %s195, 53 [#allocation2]
        %v404 = vld [vmem:[%s403] ss:$8 sm:$0x3]
        %s405 = scalar_lea.vmem %s195, 69 [#allocation2]
        %v406 = vld [vmem:[%s405] ss:$8 sm:$0x3]
        %s407 = scalar_lea.vmem %s195, 85 [#allocation2]
        %v408 = vld [vmem:[%s407] ss:$8 sm:$0x3]
        %s409 = scalar_lea.vmem %s195, 101 [#allocation2]
        %v410 = vld [vmem:[%s409] ss:$8 sm:$0x3]
        %s411 = scalar_lea.vmem %s195, 117 [#allocation2]
        %v412 = vld [vmem:[%s411] ss:$8 sm:$0x3]
        %v413 = vmul.f32 %v398, %v398
        %v414 = vmul.f32 %v400, %v400
        %v415 = vmul.f32 %v402, %v402
        %v416 = vmul.f32 %v404, %v404
        %v417 = vmul.f32 %v406, %v406
        %v418 = vmul.f32 %v408, %v408
        %v419 = vmul.f32 %v410, %v410
        %v420 = vmul.f32 %v412, %v412
        %v421 = vadd.f32 %v389, %v413
        %v422 = vadd.f32 %v390, %v414
        %v423 = vadd.f32 %v391, %v415
        %v424 = vadd.f32 %v392, %v416
        %v425 = vadd.f32 %v393, %v417
        %v426 = vadd.f32 %v394, %v418
        %v427 = vadd.f32 %v395, %v419
        %v428 = vadd.f32 %v396, %v420
        %s429 = scalar_lea.vmem %s195, 6 [#allocation2]
        %v430 = vld [vmem:[%s429] ss:$8 sm:$0x3]
        %s431 = scalar_lea.vmem %s195, 22 [#allocation2]
        %v432 = vld [vmem:[%s431] ss:$8 sm:$0x3]
        %s433 = scalar_lea.vmem %s195, 38 [#allocation2]
        %v434 = vld [vmem:[%s433] ss:$8 sm:$0x3]
        %s435 = scalar_lea.vmem %s195, 54 [#allocation2]
        %v436 = vld [vmem:[%s435] ss:$8 sm:$0x3]
        %s437 = scalar_lea.vmem %s195, 70 [#allocation2]
        %v438 = vld [vmem:[%s437] ss:$8 sm:$0x3]
        %s439 = scalar_lea.vmem %s195, 86 [#allocation2]
        %v440 = vld [vmem:[%s439] ss:$8 sm:$0x3]
        %s441 = scalar_lea.vmem %s195, 102 [#allocation2]
        %v442 = vld [vmem:[%s441] ss:$8 sm:$0x3]
        %s443 = scalar_lea.vmem %s195, 118 [#allocation2]
        %v444 = vld [vmem:[%s443] ss:$8 sm:$0x3]
        %v445 = vmul.f32 %v430, %v430
        %v446 = vmul.f32 %v432, %v432
        %v447 = vmul.f32 %v434, %v434
        %v448 = vmul.f32 %v436, %v436
        %v449 = vmul.f32 %v438, %v438
        %v450 = vmul.f32 %v440, %v440
        %v451 = vmul.f32 %v442, %v442
        %v452 = vmul.f32 %v444, %v444
        %v453 = vadd.f32 %v421, %v445
        %v454 = vadd.f32 %v422, %v446
        %v455 = vadd.f32 %v423, %v447
        %v456 = vadd.f32 %v424, %v448
        %v457 = vadd.f32 %v425, %v449
        %v458 = vadd.f32 %v426, %v450
        %v459 = vadd.f32 %v427, %v451
        %v460 = vadd.f32 %v428, %v452
        %s461 = scalar_lea.vmem %s195, 7 [#allocation2]
        %v462 = vld [vmem:[%s461] ss:$8 sm:$0x3]
        %s463 = scalar_lea.vmem %s195, 23 [#allocation2]
        %v464 = vld [vmem:[%s463] ss:$8 sm:$0x3]
        %s465 = scalar_lea.vmem %s195, 39 [#allocation2]
        %v466 = vld [vmem:[%s465] ss:$8 sm:$0x3]
        %s467 = scalar_lea.vmem %s195, 55 [#allocation2]
        %v468 = vld [vmem:[%s467] ss:$8 sm:$0x3]
        %s469 = scalar_lea.vmem %s195, 71 [#allocation2]
        %v470 = vld [vmem:[%s469] ss:$8 sm:$0x3]
        %s471 = scalar_lea.vmem %s195, 87 [#allocation2]
        %v472 = vld [vmem:[%s471] ss:$8 sm:$0x3]
        %s473 = scalar_lea.vmem %s195, 103 [#allocation2]
        %v474 = vld [vmem:[%s473] ss:$8 sm:$0x3]
        %s475 = scalar_lea.vmem %s195, 119 [#allocation2]
        %v476 = vld [vmem:[%s475] ss:$8 sm:$0x3]
        %v477 = vmul.f32 %v462, %v462
        %v478 = vmul.f32 %v464, %v464
        %v479 = vmul.f32 %v466, %v466
        %v480 = vmul.f32 %v468, %v468
        %v481 = vmul.f32 %v470, %v470
        %v482 = vmul.f32 %v472, %v472
        %v483 = vmul.f32 %v474, %v474
        %v484 = vmul.f32 %v476, %v476
        %v485 = vadd.f32 %v453, %v477
        %v486 = vadd.f32 %v454, %v478
        %v487 = vadd.f32 %v455, %v479
        %v488 = vadd.f32 %v456, %v480
        %v489 = vadd.f32 %v457, %v481
        %v490 = vadd.f32 %v458, %v482
        %v491 = vadd.f32 %v459, %v483
        %v492 = vadd.f32 %v460, %v484
        %v493 = vrsqrt.pop %v485
        %v494 = vmul.f32 %v485, %v493
        %vm495 = vcmp.eq.f32.partialorder %v485, inf
        %v496 = vsel %vm495, %v485, %v494
        %vm497 = vcmp.eq.f32.partialorder %v485, 0.0
        %v498 = vand.u32 %v485, 2147483648
        %v499 = vsel %vm497, %v498, %v496
        %v500 = vrsqrt.pop %v486
        %v501 = vmul.f32 %v486, %v500
        %vm502 = vcmp.eq.f32.partialorder %v486, inf
        %v503 = vsel %vm502, %v486, %v501
        %vm504 = vcmp.eq.f32.partialorder %v486, 0.0
        %v505 = vand.u32 %v486, 2147483648
        %v506 = vsel %vm504, %v505, %v503
        %v507 = vrsqrt.pop %v487
        %v508 = vmul.f32 %v487, %v507
        %vm509 = vcmp.eq.f32.partialorder %v487, inf
        %v510 = vsel %vm509, %v487, %v508
        %vm511 = vcmp.eq.f32.partialorder %v487, 0.0
        %v512 = vand.u32 %v487, 2147483648
        %v513 = vsel %vm511, %v512, %v510
        %v514 = vrsqrt.pop %v488
        %v515 = vmul.f32 %v488, %v514
        %vm516 = vcmp.eq.f32.partialorder %v488, inf
        %v517 = vsel %vm516, %v488, %v515
        %vm518 = vcmp.eq.f32.partialorder %v488, 0.0
        %v519 = vand.u32 %v488, 2147483648
        %v520 = vsel %vm518, %v519, %v517
        %v521 = vrsqrt.pop %v489
        %v522 = vmul.f32 %v489, %v521
        %vm523 = vcmp.eq.f32.partialorder %v489, inf
        %v524 = vsel %vm523, %v489, %v522
        %vm525 = vcmp.eq.f32.partialorder %v489, 0.0
        %v526 = vand.u32 %v489, 2147483648
        %v527 = vsel %vm525, %v526, %v524
        %v528 = vrsqrt.pop %v490
        %v529 = vmul.f32 %v490, %v528
        %vm530 = vcmp.eq.f32.partialorder %v490, inf
        %v531 = vsel %vm530, %v490, %v529
        %vm532 = vcmp.eq.f32.partialorder %v490, 0.0
        %v533 = vand.u32 %v490, 2147483648
        %v534 = vsel %vm532, %v533, %v531
        %v535 = vrsqrt.pop %v491
        %v536 = vmul.f32 %v491, %v535
        %vm537 = vcmp.eq.f32.partialorder %v491, inf
        %v538 = vsel %vm537, %v491, %v536
        %vm539 = vcmp.eq.f32.partialorder %v491, 0.0
        %v540 = vand.u32 %v491, 2147483648
        %v541 = vsel %vm539, %v540, %v538
        %v542 = vrsqrt.pop %v492
        %v543 = vmul.f32 %v492, %v542
        %vm544 = vcmp.eq.f32.partialorder %v492, inf
        %v545 = vsel %vm544, %v492, %v543
        %vm546 = vcmp.eq.f32.partialorder %v492, 0.0
        %v547 = vand.u32 %v492, 2147483648
        %v548 = vsel %vm546, %v547, %v545
        %v549 = vld [vmem:[%s204] sm:$0xff]
        %v550 = vld [vmem:[%s204 + $0x8] sm:$0xff]
        %v551 = vsub.f32 0.9, %v499
        %v552 = vsub.f32 0.9, %v506
        %v553 = vsub.f32 0.9, %v513
        %v554 = vsub.f32 0.9, %v520
        %v555 = vsub.f32 0.9, %v527
        %v556 = vsub.f32 0.9, %v534
        %v557 = vsub.f32 0.9, %v541
        %v558 = vsub.f32 0.9, %v548
        %v559 = vmax.f32 %v551, 0.0
        %v560 = vmax.f32 %v552, 0.0
        %v561 = vmax.f32 %v553, 0.0
        %v562 = vmax.f32 %v554, 0.0
        %v563 = vmax.f32 %v555, 0.0
        %v564 = vmax.f32 %v556, 0.0
        %v565 = vmax.f32 %v557, 0.0
        %v566 = vmax.f32 %v558, 0.0
        %v567 = vsub.f32 %v499, 0.1
        %v568 = vsub.f32 %v506, 0.1
        %v569 = vsub.f32 %v513, 0.1
        %v570 = vsub.f32 %v520, 0.1
        %v571 = vsub.f32 %v527, 0.1
        %v572 = vsub.f32 %v534, 0.1
        %v573 = vsub.f32 %v541, 0.1
        %v574 = vsub.f32 %v548, 0.1
        %v575 = vmax.f32 %v567, 0.0
        %v576 = vmax.f32 %v568, 0.0
        %v577 = vmax.f32 %v569, 0.0
        %v578 = vmax.f32 %v570, 0.0
        %v579 = vmax.f32 %v571, 0.0
        %v580 = vmax.f32 %v572, 0.0
        %v581 = vmax.f32 %v573, 0.0
        %v582 = vmax.f32 %v574, 0.0
        %v583 = vmul.f32 %v559, %v559
        %v584 = vmul.f32 %v560, %v560
        %v585 = vmul.f32 %v561, %v561
        %v586 = vmul.f32 %v562, %v562
        %v587 = vmul.f32 %v563, %v563
        %v588 = vmul.f32 %v564, %v564
        %v589 = vmul.f32 %v565, %v565
        %v590 = vmul.f32 %v566, %v566
        %v599 = vcombine.low %v583, %v584
        %v600 = vcombine.low %v585, %v586
        %v601 = vcombine.low %v587, %v588
        %v602 = vcombine.low %v589, %v590
        %v604 = vunpack.c.l.s4 1966171168
        %v605 = vunpack.c.0.s8 %v604
        %v606 = vlaneseq
        %v607 = vshrl.u32 %v606, 7
        %v608 = vsub.s32 %v605, %v607
        %v609 = vrot.slane %v599, %v608
        %v611 = vunpack.c.l.s4 1966171168
        %v612 = vunpack.c.0.s8 %v611
        %v613 = vlaneseq
        %v614 = vshrl.u32 %v613, 7
        %v615 = vsub.s32 %v612, %v614
        %v616 = vrot.slane %v600, %v615
        %v618 = vunpack.c.l.s4 1966171168
        %v619 = vunpack.c.0.s8 %v618
        %v620 = vlaneseq
        %v621 = vshrl.u32 %v620, 7
        %v622 = vsub.s32 %v619, %v621
        %v623 = vrot.slane %v601, %v622
        %v625 = vunpack.c.l.s4 1966171168
        %v626 = vunpack.c.0.s8 %v625
        %v627 = vlaneseq
        %v628 = vshrl.u32 %v627, 7
        %v629 = vsub.s32 %v626, %v628
        %v630 = vrot.slane %v602, %v629
        %v631 = vcombine.low %v609, %v616
        %v632 = vcombine.high %v609, %v616
        %v633 = vcombine.low %v623, %v630
        %v634 = vcombine.high %v623, %v630
        %v636 = vunpack.c.l.s4 1966171168
        %v637 = vunpack.c.0.s8 %v636
        %v638 = vlaneseq
        %v639 = vshrl.u32 %v638, 7
        %v640 = vsub.s32 %v637, %v639
        %v641 = vrot.slane %v631, %v640
        %v643 = vunpack.c.l.s4 1966171168
        %v644 = vunpack.c.0.s8 %v643
        %v645 = vlaneseq
        %v646 = vshrl.u32 %v645, 7
        %v647 = vsub.s32 %v644, %v646
        %v648 = vrot.slane %v632, %v647
        %v650 = vunpack.c.l.s4 1966171168
        %v651 = vunpack.c.0.s8 %v650
        %v652 = vlaneseq
        %v653 = vshrl.u32 %v652, 7
        %v654 = vsub.s32 %v651, %v653
        %v655 = vrot.slane %v633, %v654
        %v657 = vunpack.c.l.s4 1966171168
        %v658 = vunpack.c.0.s8 %v657
        %v659 = vlaneseq
        %v660 = vshrl.u32 %v659, 7
        %v661 = vsub.s32 %v658, %v660
        %v662 = vrot.slane %v634, %v661
        %v663 = vcombine.low %v641, %v655
        %v664 = vcombine.low %v648, %v662
        %v667 = vmul.f32 %v549, %v663
        %v668 = vmul.f32 %v550, %v664
        %v669 = vsub.f32 1.0, %v549
        %v670 = vsub.f32 1.0, %v550
        %v671 = vmul.f32 %v575, %v575
        %v672 = vmul.f32 %v576, %v576
        %v673 = vmul.f32 %v577, %v577
        %v674 = vmul.f32 %v578, %v578
        %v675 = vmul.f32 %v579, %v579
        %v676 = vmul.f32 %v580, %v580
        %v677 = vmul.f32 %v581, %v581
        %v678 = vmul.f32 %v582, %v582
        %v687 = vcombine.low %v671, %v672
        %v688 = vcombine.low %v673, %v674
        %v689 = vcombine.low %v675, %v676
        %v690 = vcombine.low %v677, %v678
        %v692 = vunpack.c.l.s4 1966171168
        %v693 = vunpack.c.0.s8 %v692
        %v694 = vlaneseq
        %v695 = vshrl.u32 %v694, 7
        %v696 = vsub.s32 %v693, %v695
        %v697 = vrot.slane %v687, %v696
        %v699 = vunpack.c.l.s4 1966171168
        %v700 = vunpack.c.0.s8 %v699
        %v701 = vlaneseq
        %v702 = vshrl.u32 %v701, 7
        %v703 = vsub.s32 %v700, %v702
        %v704 = vrot.slane %v688, %v703
        %v706 = vunpack.c.l.s4 1966171168
        %v707 = vunpack.c.0.s8 %v706
        %v708 = vlaneseq
        %v709 = vshrl.u32 %v708, 7
        %v710 = vsub.s32 %v707, %v709
        %v711 = vrot.slane %v689, %v710
        %v713 = vunpack.c.l.s4 1966171168
        %v714 = vunpack.c.0.s8 %v713
        %v715 = vlaneseq
        %v716 = vshrl.u32 %v715, 7
        %v717 = vsub.s32 %v714, %v716
        %v718 = vrot.slane %v690, %v717
        %v719 = vcombine.low %v697, %v704
        %v720 = vcombine.high %v697, %v704
        %v721 = vcombine.low %v711, %v718
        %v722 = vcombine.high %v711, %v718
        %v724 = vunpack.c.l.s4 1966171168
        %v725 = vunpack.c.0.s8 %v724
        %v726 = vlaneseq
        %v727 = vshrl.u32 %v726, 7
        %v728 = vsub.s32 %v725, %v727
        %v729 = vrot.slane %v719, %v728
        %v731 = vunpack.c.l.s4 1966171168
        %v732 = vunpack.c.0.s8 %v731
        %v733 = vlaneseq
        %v734 = vshrl.u32 %v733, 7
        %v735 = vsub.s32 %v732, %v734
        %v736 = vrot.slane %v720, %v735
        %v738 = vunpack.c.l.s4 1966171168
        %v739 = vunpack.c.0.s8 %v738
        %v740 = vlaneseq
        %v741 = vshrl.u32 %v740, 7
        %v742 = vsub.s32 %v739, %v741
        %v743 = vrot.slane %v721, %v742
        %v745 = vunpack.c.l.s4 1966171168
        %v746 = vunpack.c.0.s8 %v745
        %v747 = vlaneseq
        %v748 = vshrl.u32 %v747, 7
        %v749 = vsub.s32 %v746, %v748
        %v750 = vrot.slane %v722, %v749
        %v751 = vcombine.low %v729, %v743
        %v752 = vcombine.low %v736, %v750
        %v755 = vmul.f32 %v669, %v751
        %v756 = vmul.f32 %v670, %v752
        %v757 = vadd.f32 %v667, %v755
        %v758 = vadd.f32 %v668, %v756
        %s759 = smul.u32 %s26, 8
        %v760 = vlaneseq
        %v761 = vshrl.u32 %v760, 7
        %v762 = vstv %s759
        %v763 = vadd.s32 %v762, %v761
        %vm764 = vcmp.lt.s32.totalorder %v763, 10
        %v765 = vsel %vm764, %v757, 0.0
        %v766 = vsel %vm764, %v758, 0.0
        %v767 = vadd.f32 %v765, 0.0
        %v768 = vadd.f32 %v766, 0.0
        %v769 = vadd.f32 %v767, 0.0
        %v770 = vadd.f32 %v769, %v768
        %771 = vst [vmem:[%s229] sm:$0xff] %v770
        %s772 = sand.u32 %s100, 1
        %s773 = scalar_lea.sflag [#allocation4], %s772
        %s774 = sand.u32 %s100, 1
        %s775 = smul.addr %s774, 8
        %s776 = scalar_lea.vmem [#allocation7], %s775
        // Predicated region
        $region37: #{tpu_custom_call.1} parent=27 // pred_check
          %p777 = pneg %p110
        $region38: #{tpu_custom_call.1} parent=27 // pred_check_branch
          %779 = sbr.rel (%p777) target = $region40
        $region39: #{tpu_custom_call.1} parent=27 // pred_region
          %s781 = ssub.s32 128, 128
          %782 = vsyncadd %s773, %s781
          %s783 = sadd.s32 %s27, %s26
          %s784 = smul.addr %s783, 128
          %s785 = scalar_lea.hbm %s2, %s784
          %s787 = sshll.u32 %s776, 4
          %s788 = int_to_ptr.vmem [resolvable:$true] %s787
          %790 = dma.vmem_to_hbm [thread:$0]  %s788, 128, %s785, %s773
        $region40: #{tpu_custom_call.1} parent=27 // pred_fallthru
          _
      $region28: #{tpu_custom_call.1} parent=5 // pred_fallthru
        _
      %p791 = scmp.le.s32.totalorder 2, %s17
      // Predicated region
      $region41: #{tpu_custom_call.1} parent=5 // pred_check
        %p792 = pneg %p791
      $region42: #{tpu_custom_call.1} parent=5 // pred_check_branch
        %794 = sbr.rel (%p792) target = $region44
      $region43: #{tpu_custom_call.1} parent=5 // pred_region
        %s795 = ssub.s32 %s17, 2
        // Predicated region
        $region45: #{tpu_custom_call.1} parent=43 // pred_check
          %p796 = pneg %p116
        $region46: #{tpu_custom_call.1} parent=43 // pred_check_branch
          %798 = sbr.rel (%p796) target = $region48
        $region47: #{tpu_custom_call.1} parent=43 // pred_region
          %s799 = sand.u32 %s101, 1
          %s800 = scalar_lea.sflag [#allocation4], %s799
          %s801 = sand.u32 %s101, 1
          %s802 = smul.addr %s801, 8
          %s803 = scalar_lea.vmem [#allocation7], %s802
          %804 = dma.done %s800, 128
        $region48: #{tpu_custom_call.1} parent=43 // pred_fallthru
          _
      $region44: #{tpu_custom_call.1} parent=5 // pred_fallthru
        _
    $region6: #{tpu_custom_call.1} parent=1 // loop_footer
      %s21 = sadd.s32 1, %s17
    $region7: #{tpu_custom_call.1} parent=1 // loop_footer_branch
      %16 = sbr.rel target = $region3
    $region8: #{tpu_custom_call.1} parent=1 // loop_exit
      _
    %805 = vsyncpa [#allocation3], 1
    %s806 = scalar_lea.sflag [#allocation3], 1
    %807 = vsyncpa %s806, 1
    %808 = vsyncpa [#allocation6], 1
    %s809 = scalar_lea.sflag [#allocation6], 1
    %810 = vsyncpa %s809, 1
    %811 = vsyncpa [#allocation4], 1
    %s812 = scalar_lea.sflag [#allocation4], 1
    %813 = vsyncpa %s812, 1

</llo_original>
